<compile_context>
chip_gen: v5e
topology: v5e:2x2
jax: 0.10.0
libtpu: 0.0.40
codegen_flags: <defaults>
</compile_context>

<pallas_src>
import functools

import jax
import jax.numpy as jnp
from jax.experimental import pallas as pl
from jax.experimental.pallas import tpu as pltpu


def _mlp_kernel(x_ref, w1_ref, b1_ref, w2_ref, b2_ref, o_ref, *, chunk):
    # x_ref : [8, TB]  bf16  (features on sublanes, batch tile on lanes)
    # w1_ref: [64, 8]  bf16  (W1 transposed, resident)
    # b1_ref: [64, 1]  f32
    # w2_ref: [64, 1]  f32
    # b2_ref: [1, 1]   f32   (SMEM scalar)
    # o_ref : [1, TB]  f32   (lane-dense output tile)
    n_chunks = x_ref.shape[1] // chunk

    # Small resident operands: load once, reuse across all chunks.
    w1 = w1_ref[...]
    b1 = b1_ref[...]
    w2 = w2_ref[...]
    b2 = b2_ref[0, 0]

    # Loop over lane slices of the (large) resident tile so the [64, chunk]
    # f32 intermediate stays small while the HBM tile stays huge.
    @pl.loop(0, n_chunks)
    def _(c):
        start = pl.multiple_of(c * chunk, chunk)
        xs = x_ref[:, pl.ds(start, chunk)]                        # [8, chunk] bf16
        h = jnp.dot(w1, xs, preferred_element_type=jnp.float32)   # MXU, f32 acc
        h = jnp.maximum(h + b1, 0.0)                              # bias + ReLU
        # Second layer (64 -> 1): VPU multiply + sublane (XLU) reduce.
        y = jnp.sum(h * w2, axis=0, keepdims=True)                # [1, chunk]
        o_ref[:, pl.ds(start, chunk)] = y + b2


def _round_up(n, m):
    return ((n + m - 1) // m) * m


def _choose_tiles(batch, tile_b, chunk):
    """Pick (tb, chunk, padded_batch). tb % chunk == 0, chunk % 128 == 0."""
    b128 = _round_up(max(batch, 1), 128)
    # Requested tile, lane-aligned, never larger than the padded batch.
    tb = min(_round_up(max(tile_b, 128), 128), b128)
    # Prefer >= 2 balanced grid steps when the batch can fill them
    # (v7x megacore; no effect on v5e/v6e beyond pipelining).
    half = _round_up((b128 + 1) // 2, 128)
    if b128 >= 2 * 128 and tb > half:
        tb = half
    # Compute chunk bounds the in-kernel [64, chunk] intermediate.
    chunk = min(_round_up(max(chunk, 128), 128), tb)
    tb = _round_up(tb, chunk)          # whole number of chunks per tile
    padded = _round_up(b128, tb)
    return tb, chunk, padded


def regression_net_forward(x, w1, b1, w2, b2, *, tile_b=32768, chunk=2048):
    """Pallas forward for RegressionNet: Linear(8,64) -> ReLU -> Linear(64,1) -> squeeze.

    x : [batch, 8] f32;  w1: [8, 64];  b1: [1, 64];  w2: [64, 1];  b2: [1, 1]
    """
    batch, feat = x.shape
    tb, chunk, padded = _choose_tiles(batch, tile_b, chunk)

    # bf16 MXU operands (single pass), f32 accumulation inside the kernel.
    # Cast *before* the transpose+pad so the un-hidden HBM copy is half size.
    # TODO(synk): have the caller produce x feature-major (and bf16) so this
    # wrapper-side transpose+pad copy disappears entirely.
    x_t = jnp.pad(x.astype(jnp.bfloat16).T, ((0, 0), (0, padded - batch)))  # [8, padded]
    w1_t = w1.astype(jnp.bfloat16).T                  # [64, 8]
    b1_c = b1.reshape(64, 1).astype(jnp.float32)      # [64, 1]
    w2_c = w2.reshape(64, 1).astype(jnp.float32)      # [64, 1]
    b2_s = b2.reshape(1, 1).astype(jnp.float32)       # [1, 1] -> SMEM

    grid = (padded // tb,)
    kernel = functools.partial(_mlp_kernel, chunk=chunk)

    out = pl.pallas_call(
        kernel,
        out_shape=jax.ShapeDtypeStruct((1, padded), jnp.float32),
        grid_spec=pltpu.PrefetchScalarGridSpec(
            num_scalar_prefetch=0,
            grid=grid,
            in_specs=[
                # Large x tile marches over the batch; double-buffered by Pallas.
                pl.BlockSpec((feat, tb), lambda i: (0, i)),
                # Weights/biases: constant block index -> resident across grid.
                pl.BlockSpec((64, feat), lambda i: (0, 0)),
                pl.BlockSpec((64, 1), lambda i: (0, 0)),
                pl.BlockSpec((64, 1), lambda i: (0, 0)),
                # Scalar bias lives in SMEM (no lane-padded VMEM tile / DMA).
                pl.BlockSpec(memory_space=pltpu.MemorySpace.SMEM),
            ],
            out_specs=pl.BlockSpec((1, tb), lambda i: (0, i)),
        ),
        compiler_params=pltpu.CompilerParams(
            # Independent batch tiles -> megacore sharding on v7x.
            dimension_semantics=("parallel",),
            # Chunked compute keeps the footprint at a few MiB; 32 MiB is a
            # safe explicit budget on v5e/v6e/v7x alike.
            vmem_limit_bytes=32 * 1024 * 1024,
        ),
    )(x_t, w1_t, b1_c, w2_c, b2_s)

    # .squeeze() in the PyTorch module: drop padding and the size-1 out dim.
    return out[0, :batch]


def init_params(key):
    """Deterministic init mirroring nn.Linear default (uniform +/- 1/sqrt(fan_in))."""
    k1, k2, k3, k4 = jax.random.split(key, 4)
    lim1 = 1.0 / jnp.sqrt(8.0)
    lim2 = 1.0 / jnp.sqrt(64.0)
    w1 = jax.random.uniform(k1, (8, 64), jnp.float32, -lim1, lim1)
    b1 = jax.random.uniform(k2, (1, 64), jnp.float32, -lim1, lim1)
    w2 = jax.random.uniform(k3, (64, 1), jnp.float32, -lim2, lim2)
    b2 = jax.random.uniform(k4, (1, 1), jnp.float32, -lim2, lim2)
    return w1, b1, w2, b2


def _reference_f32(x, w1, b1, w2, b2):
    """Full-precision reference (matches the PyTorch f32 forward)."""
    h = jax.lax.dot(x, w1, precision=jax.lax.Precision.HIGHEST,
                    preferred_element_type=jnp.float32)
    h = jnp.maximum(h + b1, 0.0)
    return jnp.sum(h * w2.reshape(1, -1), axis=-1) + b2.reshape(())


def _reference_mixed(x, w1, b1, w2, b2):
    """Reference with the same bf16-operand / f32-accumulation first layer."""
    h = jax.lax.dot(x.astype(jnp.bfloat16), w1.astype(jnp.bfloat16),
                    preferred_element_type=jnp.float32)
    h = jnp.maximum(h + b1, 0.0)
    return jnp.sum(h * w2.reshape(1, -1), axis=-1) + b2.reshape(())


if __name__ == "__main__":
    key = jax.random.PRNGKey(0)
    k_x, k_p, k_x2 = jax.random.split(key, 3)

    w1, b1, w2, b2 = init_params(k_p)

    # Small batch (single grid step, padded 8 -> 128 lanes).
    batch = 8
    x = jax.random.normal(k_x, (batch, 8), jnp.float32)
    y = regression_net_forward(x, w1, b1, w2, b2)
    jax.block_until_ready(y)
    assert y.shape == (batch,)
    assert jnp.allclose(y, _reference_mixed(x, w1, b1, w2, b2), atol=1e-4), \
        "mismatch vs bf16-operand reference (batch=8)"
    assert jnp.allclose(y, _reference_f32(x, w1, b1, w2, b2), atol=3e-2, rtol=3e-2), \
        "mismatch vs f32 reference (batch=8)"

    # Multi-tile batch with a ragged tail (exercises the grid + padding path).
    batch2 = 300
    x2 = jax.random.normal(k_x2, (batch2, 8), jnp.float32)
    y2 = regression_net_forward(x2, w1, b1, w2, b2, tile_b=128)
    jax.block_until_ready(y2)
    assert y2.shape == (batch2,)
    assert jnp.allclose(y2, _reference_mixed(x2, w1, b1, w2, b2), atol=1e-4), \
        "mismatch vs bf16-operand reference (batch=300)"
    assert jnp.allclose(y2, _reference_f32(x2, w1, b1, w2, b2), atol=3e-2, rtol=3e-2), \
        "mismatch vs f32 reference (batch=300)"

    # Unaligned caller tile_b (exercises rounding fix + 2-step megacore split).
    y3 = regression_net_forward(x2, w1, b1, w2, b2, tile_b=1000)
    jax.block_until_ready(y3)
    assert y3.shape == (batch2,)
    assert jnp.allclose(y3, _reference_mixed(x2, w1, b1, w2, b2), atol=1e-4), \
        "mismatch vs bf16-operand reference (tile_b=1000)"

    print("KERNEL_OK")
</pallas_src>

<mosaic_0001>
module attributes {stable_mosaic.version = 11 : i64} {
  func.func @_mlp_kernel(%arg0: i32, %arg1: memref<8x128xbf16, #tpu.memory_space<vmem>>, %arg2: memref<64x8xbf16, #tpu.memory_space<vmem>>, %arg3: memref<64x1xf32, #tpu.memory_space<vmem>>, %arg4: memref<64x1xf32, #tpu.memory_space<vmem>>, %arg5: memref<1x1xf32, #tpu.memory_space<smem>>, %arg6: memref<1x128xf32, #tpu.memory_space<vmem>>) attributes {dimension_semantics = [#tpu.dimension_semantics<parallel>], iteration_bounds = array<i64: 1>, scalar_prefetch = 0 : i64, scratch_operands = 0 : i64, tpu.core_type = #tpu.core_type<tc>, window_params = [{transform_indices = @transform_0, window_bounds = array<i64: 8, 128>}, {pipeline_mode = #tpu.pipeline_mode<synchronous>, transform_indices = @transform_1, window_bounds = array<i64: 64, 8>}, {pipeline_mode = #tpu.pipeline_mode<synchronous>, transform_indices = @transform_2, window_bounds = array<i64: 64, 1>}, {pipeline_mode = #tpu.pipeline_mode<synchronous>, transform_indices = @transform_3, window_bounds = array<i64: 64, 1>}, {transform_indices = @transform_4, window_bounds = array<i64: 1, 1>}, {transform_indices = @transform_5, window_bounds = array<i64: 1, 128>}]} {
    %c0 = arith.constant 0 : index
    %c0_0 = arith.constant 0 : index
    %0 = vector.load %arg2[%c0, %c0_0] : memref<64x8xbf16, #tpu.memory_space<vmem>>, vector<64x8xbf16>
    %c0_1 = arith.constant 0 : index
    %c0_2 = arith.constant 0 : index
    %1 = vector.load %arg3[%c0_1, %c0_2] : memref<64x1xf32, #tpu.memory_space<vmem>>, vector<64x1xf32>
    %c0_3 = arith.constant 0 : index
    %c0_4 = arith.constant 0 : index
    %2 = vector.load %arg4[%c0_3, %c0_4] : memref<64x1xf32, #tpu.memory_space<vmem>>, vector<64x1xf32>
    %c0_5 = arith.constant 0 : index
    %c0_6 = arith.constant 0 : index
    %3 = memref.load %arg5[%c0_5, %c0_6] : memref<1x1xf32, #tpu.memory_space<smem>>
    %c0_i32 = arith.constant 0 : i32
    %c1_i32 = arith.constant 1 : i32
    %4 = arith.muli %c0_i32, %c1_i32 : i32
    %c0_i32_7 = arith.constant 0 : i32
    %5 = arith.addi %c0_i32_7, %4 : i32
    %c128_i32 = arith.constant 128 : i32
    %6 = arith.muli %5, %c128_i32 : i32
    %7 = tpu.assume_multiple %6, 128 : i32
    %c0_8 = arith.constant 0 : index
    %8 = arith.index_cast %7 : i32 to index
    %9 = vector.load %arg1[%c0_8, %8] : memref<8x128xbf16, #tpu.memory_space<vmem>>, vector<8x128xbf16>
    %cst = arith.constant dense<0.000000e+00> : vector<64x128xf32>
    %10 = tpu.matmul %0, %9, %cst {dimension_numbers = #tpu.dot_dimension_numbers<[1], [0], [0], [1], [0, 0, 1, 1], [], []>} : vector<64x8xbf16>, vector<8x128xbf16>, vector<64x128xf32> -> vector<64x128xf32>
    %11 = vector.broadcast %1 : vector<64x1xf32> to vector<64x128xf32>
    %12 = arith.addf %10, %11 : vector<64x128xf32>
    %cst_9 = arith.constant 0.000000e+00 : f32
    %13 = vector.broadcast %cst_9 : f32 to vector<64x128xf32>
    %14 = arith.maximumf %12, %13 : vector<64x128xf32>
    %15 = vector.broadcast %2 : vector<64x1xf32> to vector<64x128xf32>
    %16 = arith.mulf %14, %15 : vector<64x128xf32>
    %cst_10 = arith.constant dense<0.000000e+00> : vector<128xf32>
    %17 = vector.multi_reduction <add>, %16, %cst_10 [0] : vector<64x128xf32> to vector<128xf32>
    %18 = vector.shape_cast %17 : vector<128xf32> to vector<1x128xf32>
    %19 = vector.broadcast %3 : f32 to vector<1x128xf32>
    %20 = arith.addf %18, %19 : vector<1x128xf32>
    %c0_11 = arith.constant 0 : index
    %21 = arith.index_cast %7 : i32 to index
    %22 = vector.load %arg6[%c0_11, %21] : memref<1x128xf32, #tpu.memory_space<vmem>>, vector<1x128xf32>
    tpu.vector_store %arg6[%c0_11, %21], %20 {strides = array<i32>} : memref<1x128xf32, #tpu.memory_space<vmem>>, vector<1x128xf32>,
    %c1_i32_12 = arith.constant 1 : i32
    return
  }
  func.func @transform_0(%arg0: i32) -> (i32, i32) {
    %c0_i32 = arith.constant 0 : i32
    %c0_i32_0 = arith.constant 0 : i32
    return %c0_i32, %arg0 : i32, i32
  }
  func.func @transform_1(%arg0: i32) -> (i32, i32) {
    %c0_i32 = arith.constant 0 : i32
    %c0_i32_0 = arith.constant 0 : i32
    %c0_i32_1 = arith.constant 0 : i32
    return %c0_i32, %c0_i32_0 : i32, i32
  }
  func.func @transform_2(%arg0: i32) -> (i32, i32) {
    %c0_i32 = arith.constant 0 : i32
    %c0_i32_0 = arith.constant 0 : i32
    %c0_i32_1 = arith.constant 0 : i32
    return %c0_i32, %c0_i32_0 : i32, i32
  }
  func.func @transform_3(%arg0: i32) -> (i32, i32) {
    %c0_i32 = arith.constant 0 : i32
    %c0_i32_0 = arith.constant 0 : i32
    %c0_i32_1 = arith.constant 0 : i32
    return %c0_i32, %c0_i32_0 : i32, i32
  }
  func.func @transform_4(%arg0: i32) -> (i32, i32) {
    %c0_i32 = arith.constant 0 : i32
    %c0_i32_0 = arith.constant 0 : i32
    %c0_i32_1 = arith.constant 0 : i32
    return %c0_i32, %c0_i32_0 : i32, i32
  }
  func.func @transform_5(%arg0: i32) -> (i32, i32) {
    %c0_i32 = arith.constant 0 : i32
    %c0_i32_0 = arith.constant 0 : i32
    return %c0_i32, %arg0 : i32, i32
  }
}

</mosaic_0001>

<llo_original>
// kernel: tpu_custom_call.1
$region0: #{tpu_custom_call.1}
  #allocation0 [shape = 'u32[]', space=smem, size = 0x4, offset = 0x4, fixed_abs, tag = 'smem constant byte address 0x4 - core index']
  #allocation1 [shape = 'u32[72,128]{1,0:T(1,128)}', space=vmem, size = 0x9000, scoped, tag = 'internal scratch']
  #allocation2 [shape = 'f32[1,1]{1,0:T(1,128)S(6)}', space=smem, size = 0x200, scoped, tag = 'scoped memory for tpu_custom_call.1']
  %s0 = inlined_call_operand.vmem [shape: bf16[8,128], index: 0, kind: input, shape index: {}]
  %s1 = inlined_call_operand.vmem [shape: bf16[64,8], index: 1, kind: input, shape index: {}]
  %s2 = inlined_call_operand.vmem [shape: f32[64,1], index: 2, kind: input, shape index: {}]
  %s3 = inlined_call_operand.vmem [shape: f32[64,1], index: 3, kind: input, shape index: {}]
  %s4 = inlined_call_operand.<no memory space> [shape: f32[1,1], index: 4, kind: input, shape index: {}]
  %s5 = inlined_call_operand.hbm [shape: f32[1,128], index: 5, kind: output, shape index: {}]
  %s6 = sld [smem:[#allocation0]]
  $region30: #{tpu_custom_call.1} parent=0
    _
  %s8 = ssub.s32 1, %s6
  %s9 = scalar_select 0, %s8, %s6
  %10 = sst [smem:[#allocation2]] %s4
  $region1: #{tpu_custom_call.1} parent=0
    #allocation3 [shape = 'u8[512]{0}', space=vmem, size = 0x400, scoped, tag = 'output window, operand 0, single buffered']
    #allocation4 [shape = 's32[1]{0}', space=sflag, size = 0x4, scoped, tag = 'scoped memory for tpu_custom_call.1']
    %11 = vsyncpa [#allocation4], 0
    // Predicated region
    $region2: #{tpu_custom_call.1} parent=1 // pred_check
      _
    $region3: #{tpu_custom_call.1} parent=1 // pred_check_branch
      %13 = sbr.rel (0) target = $region5
    $region4: #{tpu_custom_call.1} parent=1 // pred_region
      _
    $region5: #{tpu_custom_call.1} parent=1 // pred_fallthru
      _
    // Predicated region
    $region6: #{tpu_custom_call.1} parent=1 // pred_check
      _
    $region7: #{tpu_custom_call.1} parent=1 // pred_check_branch
      %15 = sbr.rel (0) target = $region9
    $region8: #{tpu_custom_call.1} parent=1 // pred_region
      _
    $region9: #{tpu_custom_call.1} parent=1 // pred_fallthru
      _
    // Predicated region
    $region10: #{tpu_custom_call.1} parent=1 // pred_check
      _
    $region11: #{tpu_custom_call.1} parent=1 // pred_check_branch
      %17 = sbr.rel (0) target = $region13
    $region12: #{tpu_custom_call.1} parent=1 // pred_region
      _
    $region13: #{tpu_custom_call.1} parent=1 // pred_fallthru
      _
    // Predicated region
    $region14: #{tpu_custom_call.1} parent=1 // pred_check
      _
    $region15: #{tpu_custom_call.1} parent=1 // pred_check_branch
      %19 = sbr.rel (0) target = $region17
    $region16: #{tpu_custom_call.1} parent=1 // pred_region
      _
    $region17: #{tpu_custom_call.1} parent=1 // pred_fallthru
      _
    // Predicated region
    $region18: #{tpu_custom_call.1} parent=1 // pred_check
      _
    $region19: #{tpu_custom_call.1} parent=1 // pred_check_branch
      %21 = sbr.rel (0) target = $region21
    $region20: #{tpu_custom_call.1} parent=1 // pred_region
      _
    $region21: #{tpu_custom_call.1} parent=1 // pred_fallthru
      _
    %v23 = vld [vmem:[%s1] sm:$0xf]
    %v24 = vld [vmem:[%s1 + $0x4] sm:$0xf]
    %v25 = vld [vmem:[%s1 + $0x8] sm:$0xf]
    %v26 = vld [vmem:[%s1 + $0xc] sm:$0xf]
    %v27 = vld [vmem:[%s1 + $0x10] sm:$0xf]
    %v28 = vld [vmem:[%s1 + $0x14] sm:$0xf]
    %v29 = vld [vmem:[%s1 + $0x18] sm:$0xf]
    %v30 = vld [vmem:[%s1 + $0x1c] sm:$0xf]
    %v31 = vld [vmem:[%s2] sm:$0xff]
    %v32 = vld [vmem:[%s2 + $0x8] sm:$0xff]
    %v33 = vld [vmem:[%s2 + $0x10] sm:$0xff]
    %v34 = vld [vmem:[%s2 + $0x18] sm:$0xff]
    %v35 = vld [vmem:[%s2 + $0x20] sm:$0xff]
    %v36 = vld [vmem:[%s2 + $0x28] sm:$0xff]
    %v37 = vld [vmem:[%s2 + $0x30] sm:$0xff]
    %v38 = vld [vmem:[%s2 + $0x38] sm:$0xff]
    %v39 = vld [vmem:[%s3] sm:$0xff]
    %v40 = vld [vmem:[%s3 + $0x8] sm:$0xff]
    %v41 = vld [vmem:[%s3 + $0x10] sm:$0xff]
    %v42 = vld [vmem:[%s3 + $0x18] sm:$0xff]
    %v43 = vld [vmem:[%s3 + $0x20] sm:$0xff]
    %v44 = vld [vmem:[%s3 + $0x28] sm:$0xff]
    %v45 = vld [vmem:[%s3 + $0x30] sm:$0xff]
    %v46 = vld [vmem:[%s3 + $0x38] sm:$0xff]
    %s47 = sld [smem:[#allocation2]]
    %v48 = vld [vmem:[%s0] sm:$0xf]
    %50 = vset.pattern.permute.xlu0 0
    %51 = vperm.xlu0 %50, %v31
    %v52 = vpop.permute.xlu0 %51
    %55 = vset.pattern.permute.xlu0 0
    %56 = vperm.xlu0 %55, %v32
    %v57 = vpop.permute.xlu0 %56
    %60 = vset.pattern.permute.xlu0 0
    %61 = vperm.xlu0 %60, %v33
    %v62 = vpop.permute.xlu0 %61
    %65 = vset.pattern.permute.xlu0 0
    %66 = vperm.xlu0 %65, %v34
    %v67 = vpop.permute.xlu0 %66
    %70 = vset.pattern.permute.xlu0 0
    %71 = vperm.xlu0 %70, %v35
    %v72 = vpop.permute.xlu0 %71
    %75 = vset.pattern.permute.xlu0 0
    %76 = vperm.xlu0 %75, %v36
    %v77 = vpop.permute.xlu0 %76
    %80 = vset.pattern.permute.xlu0 0
    %81 = vperm.xlu0 %80, %v37
    %v82 = vpop.permute.xlu0 %81
    %85 = vset.pattern.permute.xlu0 0
    %86 = vperm.xlu0 %85, %v38
    %v87 = vpop.permute.xlu0 %86
    %v97 = vunpack.c.l.b16 %v23
    %v98 = vunpack.c.l.b16 %v24
    %v99 = vunpack.c.l.b16 %v25
    %v100 = vunpack.c.l.b16 %v26
    %v101 = vunpack.c.l.b16 %v27
    %v102 = vunpack.c.l.b16 %v28
    %v103 = vunpack.c.l.b16 %v29
    %v104 = vunpack.c.l.b16 %v30
    %v105 = vpack.c.b16 %v98, %v97
    %v106 = vpack.c.b16 %v100, %v99
    %v107 = vpack.c.b16 %v102, %v101
    %v108 = vpack.c.b16 %v104, %v103
    %vm109 = vcmask 64512
    %v111 = vsel %vm109, %v105, 0
    %v114 = vsel %vm109, %v106, 0
    %v117 = vsel %vm109, %v107, 0
    %v120 = vsel %vm109, %v108, 0
    %vm122 = vcmask 1043456
    %v124 = vsel %vm122, %v48, 0
    %126 = vmatpush.bf16.msra.mxu0 0
    %127 = vmatpush.bf16.msra.mxu0 0
    %128 = vmatpush.bf16.msra.mxu0 0
    %129 = vmatpush.bf16.msra.mxu0 0
    %130 = vmatpush.bf16.msra.mxu0 0
    %131 = vmatpush.bf16.msra.mxu0 0
    %132 = vmatpush.bf16.msra.mxu0 0
    %133 = vmatpush.bf16.msra.mxu0 %v124
    %134 = vmatmul.bf16.gmra.mxu0 %v111
    %v135 = vpop.f32.mrf.mxu0
    %v136 = vadd.f32 %v52, %v135
    %v137 = vpop.f32.mrf.mxu0
    %v138 = vadd.f32 %v57, %v137
    %139 = vmatmul.bf16.gmra.mxu0 %v114
    %v140 = vpop.f32.mrf.mxu0
    %v141 = vadd.f32 %v62, %v140
    %v142 = vpop.f32.mrf.mxu0
    %v143 = vadd.f32 %v67, %v142
    %144 = vmatmul.bf16.gmra.mxu0 %v117
    %v145 = vpop.f32.mrf.mxu0
    %v146 = vadd.f32 %v72, %v145
    %v147 = vpop.f32.mrf.mxu0
    %v148 = vadd.f32 %v77, %v147
    %149 = vmatmul.bf16.gmra.mxu0 %v120
    %v150 = vpop.f32.mrf.mxu0
    %v151 = vadd.f32 %v82, %v150
    %v152 = vpop.f32.mrf.mxu0
    %v153 = vadd.f32 %v87, %v152
    %154 = vdwg.mxu0
    %v155 = vmax.f32 %v136, 0.0
    %v156 = vmax.f32 %v138, 0.0
    %v157 = vmax.f32 %v141, 0.0
    %v158 = vmax.f32 %v143, 0.0
    %v159 = vmax.f32 %v146, 0.0
    %v160 = vmax.f32 %v148, 0.0
    %v161 = vmax.f32 %v151, 0.0
    %v162 = vmax.f32 %v153, 0.0
    %164 = vset.pattern.permute.xlu0 0
    %165 = vperm.xlu0 %164, %v39
    %v166 = vpop.permute.xlu0 %165
    %169 = vset.pattern.permute.xlu0 0
    %170 = vperm.xlu0 %169, %v40
    %v171 = vpop.permute.xlu0 %170
    %174 = vset.pattern.permute.xlu0 0
    %175 = vperm.xlu0 %174, %v41
    %v176 = vpop.permute.xlu0 %175
    %179 = vset.pattern.permute.xlu0 0
    %180 = vperm.xlu0 %179, %v42
    %v181 = vpop.permute.xlu0 %180
    %184 = vset.pattern.permute.xlu0 0
    %185 = vperm.xlu0 %184, %v43
    %v186 = vpop.permute.xlu0 %185
    %189 = vset.pattern.permute.xlu0 0
    %190 = vperm.xlu0 %189, %v44
    %v191 = vpop.permute.xlu0 %190
    %194 = vset.pattern.permute.xlu0 0
    %195 = vperm.xlu0 %194, %v45
    %v196 = vpop.permute.xlu0 %195
    %199 = vset.pattern.permute.xlu0 0
    %200 = vperm.xlu0 %199, %v46
    %v201 = vpop.permute.xlu0 %200
    %v203 = vmul.f32 %v155, %v166
    %v204 = vmul.f32 %v156, %v171
    %v205 = vmul.f32 %v157, %v176
    %v206 = vmul.f32 %v158, %v181
    %v207 = vmul.f32 %v159, %v186
    %v208 = vmul.f32 %v160, %v191
    %v209 = vmul.f32 %v161, %v196
    %v210 = vmul.f32 %v162, %v201
    %v211 = vadd.f32 %v203, %v204
    %v212 = vadd.f32 %v211, %v205
    %v213 = vadd.f32 %v212, %v206
    %v214 = vadd.f32 %v213, %v207
    %v215 = vadd.f32 %v214, %v208
    %v216 = vadd.f32 %v215, %v209
    %v217 = vadd.f32 %v216, %v210
    %v218 = vrot.slane %v217, 4
    %v219 = vadd.f32 %v217, %v218
    %v220 = vrot.slane %v219, 2
    %v221 = vadd.f32 %v219, %v220
    %v222 = vrot.slane %v221, 1
    %v223 = vadd.f32 %v221, %v222
    %v224 = vstv %s47
    %v225 = vadd.f32 %v223, %v224
    %226 = vst [vmem:[#allocation3] sm:$0x1] %v225
    // Predicated region
    $region22: #{tpu_custom_call.1} parent=1 // pred_check
      _
    $region23: #{tpu_custom_call.1} parent=1 // pred_check_branch
      %228 = sbr.rel (0) target = $region25
    $region24: #{tpu_custom_call.1} parent=1 // pred_region
      %230 = vsyncadd [#allocation4], 0
      %s232 = sshll.u32 [#allocation3], 4
      %s233 = int_to_ptr.vmem [resolvable:$true] %s232
      %s234 = sshll.u32 %s5, 4
      %s235 = int_to_ptr.hbm [resolvable:$true] %s234
      %237 = dma.vmem_to_hbm [thread:$0]  %s233, 16, %s235, [#allocation4]
    $region25: #{tpu_custom_call.1} parent=1 // pred_fallthru
      _
    // Predicated region
    $region26: #{tpu_custom_call.1} parent=1 // pred_check
      _
    $region27: #{tpu_custom_call.1} parent=1 // pred_check_branch
      %239 = sbr.rel (0) target = $region29
    $region28: #{tpu_custom_call.1} parent=1 // pred_region
      %241 = dma.done [#allocation4], 16
    $region29: #{tpu_custom_call.1} parent=1 // pred_fallthru
      _
    %242 = vsyncpa [#allocation4], 1

</llo_original>
